<compile_context>
chip_gen: v7x
topology: tpu7x:2x2x1
jax: 0.10.0
libtpu: 0.0.40
codegen_flags: <defaults>
</compile_context>

<pallas_src>
import functools

import jax
import jax.numpy as jnp
from jax.experimental import pallas as pl
from jax.experimental.pallas import tpu as pltpu


_NEG_BIG = float(jnp.finfo(jnp.float32).min)  # finite "-inf" (avoids inf-inf NaNs)


def _cross_entropy_kernel(logits_ref, targets_ref, nll_ref,
                          m_ref, l_ref, pick_ref, *, n_true, c_true):
    """Online-logsumexp NLL for one (TM, TC) logits slab of a row tile."""
    i = pl.program_id(0)            # row-tile index
    j = pl.program_id(1)            # class-chunk index (reduction axis)
    tm, tc = logits_ref.shape

    @pl.when(j == 0)
    def _init():
        m_ref[...] = jnp.full(m_ref.shape, _NEG_BIG, m_ref.dtype)
        l_ref[...] = jnp.zeros(l_ref.shape, l_ref.dtype)
        pick_ref[...] = jnp.zeros(pick_ref.shape, pick_ref.dtype)

    x = logits_ref[...].astype(jnp.float32)    # (TM, TC)
    tgt = targets_ref[...]                     # (TM, 1) int32

    # Global class ids of this chunk (padded class lanes -> masked out).
    col_ids = j * tc + jax.lax.broadcasted_iota(jnp.int32, (tm, tc), 1)

    # --- online logsumexp update (running max m, running sum l) ---
    x_lse = jnp.where(col_ids < c_true, x, _NEG_BIG)
    m_old = m_ref[...]
    m_new = jnp.maximum(m_old, jnp.max(x_lse, axis=-1, keepdims=True))
    l_ref[...] = (l_ref[...] * jnp.exp(m_old - m_new)
                  + jnp.sum(jnp.exp(x_lse - m_new), axis=-1, keepdims=True))
    m_ref[...] = m_new

    # --- target-logit pick straight from the raw logits (no shifted tile) ---
    pick_ref[...] += jnp.sum(
        jnp.where(col_ids == tgt, x, 0.0), axis=-1, keepdims=True)

    @pl.when(j == pl.num_programs(1) - 1)
    def _finalize():
        nll = m_ref[...] + jnp.log(l_ref[...]) - pick_ref[...]
        # Mask padded tail rows so the wrapper can divide by the true N.
        row_ids = i * tm + jax.lax.broadcasted_iota(jnp.int32, (tm, 1), 0)
        nll_ref[...] = jnp.where(row_ids < n_true, nll, 0.0)


def _choose_tiling(n, c, in_itemsize):
    """Pick (vmem_limit_bytes, TM, TC) from the true f32 working-set cost.

    Per-step footprint ~= 2 * TM*TC*in_itemsize   (double-buffered input tile)
                        + 3 * TM*TC*4             (f32 upcast/intermediates)
    budgeted against the generation's VMEM capacity.
    """
    try:
        info = pltpu.get_tpu_info()
        vmem_cap = int(getattr(info, "vmem_capacity_bytes", 64 * 1024 * 1024))
    except Exception:  # pragma: no cover - fall back to the smallest (v7x) figure
        vmem_cap = 64 * 1024 * 1024

    vmem_limit = min((vmem_cap * 3) // 4, 64 * 1024 * 1024)
    budget = int(vmem_limit * 0.70)           # headroom for output/scratch/internal

    per_elem = 2 * in_itemsize + 3 * 4        # bytes per (row, class) element live
    n8 = ((n + 7) // 8) * 8

    # Prefer keeping the whole class axis resident when the row tile that
    # fits is still reasonably large (fewer grid steps, single-pass lse).
    tm_full_c = (budget // max(1, c * per_elem)) // 8 * 8
    if tm_full_c >= 64:
        tm = int(max(8, min(8192, tm_full_c, n8)))
        tc = int(c)
    else:
        # Huge vocab: chunk the class axis; online logsumexp in the kernel.
        tm = int(max(8, min(256, n8)))
        tc = (budget // max(1, tm * per_elem)) // 128 * 128
        tc = int(max(128, min(tc, ((c + 127) // 128) * 128)))
        if tc >= c:
            tc = int(c)
    return int(vmem_limit), tm, tc


def cross_entropy(logits, targets, *, block_rows=None, block_classes=None):
    """logits: (N, C) float, targets: (N,) int. Returns scalar mean NLL.

    block_rows / block_classes are test-only overrides; block_classes must be
    a multiple of 128 or equal to C.
    """
    n, c = logits.shape
    in_itemsize = jnp.dtype(logits.dtype).itemsize

    vmem_limit, tm, tc = _choose_tiling(n, c, in_itemsize)
    if block_rows is not None:
        tm = max(8, (int(block_rows) // 8) * 8)
    if block_classes is not None:
        tc = int(block_classes)

    num_row_tiles = pl.cdiv(n, tm)
    num_class_tiles = pl.cdiv(c, tc)
    n_pad = num_row_tiles * tm
    c_pad = num_class_tiles * tc

    # Pad so every grid step sees a full (TM, TC) block; the kernel masks
    # padded classes/rows and the wrapper divides by the true N.
    if n_pad != n or c_pad != c:
        logits = jnp.pad(logits, ((0, n_pad - n), (0, c_pad - c)))
    if n_pad != n:
        targets = jnp.pad(targets, (0, n_pad - n))
    targets2d = targets.astype(jnp.int32).reshape(n_pad, 1)

    kernel = functools.partial(_cross_entropy_kernel, n_true=n, c_true=c)

    cost = pl.CostEstimate(
        flops=int(6 * n * c),
        transcendentals=int(n * c + n),
        bytes_accessed=int(n * c * in_itemsize + n * 4 + n * 4),
    )

    per_row_nll = pl.pallas_call(
        kernel,
        out_shape=jax.ShapeDtypeStruct((n_pad, 1), jnp.float32),
        grid_spec=pltpu.PrefetchScalarGridSpec(
            num_scalar_prefetch=0,
            grid=(num_row_tiles, num_class_tiles),
            in_specs=[
                pl.BlockSpec((tm, tc), lambda i, j: (i, j)),
                pl.BlockSpec((tm, 1), lambda i, j: (i, 0)),
            ],
            out_specs=pl.BlockSpec((tm, 1), lambda i, j: (i, 0)),
            scratch_shapes=[
                pltpu.VMEM((tm, 1), jnp.float32),   # running max  m
                pltpu.VMEM((tm, 1), jnp.float32),   # running sum  l
                pltpu.VMEM((tm, 1), jnp.float32),   # picked target logit
            ],
        ),
        compiler_params=pltpu.CompilerParams(
            dimension_semantics=("parallel", "arbitrary"),
            vmem_limit_bytes=int(vmem_limit),
        ),
        cost_estimate=cost,
    )(logits, targets2d)

    # Tiny final reduction in XLA; padded rows are already zero.
    return jnp.sum(per_row_nll) / jnp.float32(n)


if __name__ == "__main__":
    key = jax.random.PRNGKey(0)
    k1, k2, k3, k4 = jax.random.split(key, 4)

    # Case 1: default tiling; N=10 is not a multiple of 8, exercising the
    # row-padding / tail-masking path.
    N, C = 10, 32
    logits = jax.random.normal(k1, (N, C), dtype=jnp.float32)
    targets = jax.random.randint(k2, (N,), 0, C, dtype=jnp.int32)
    loss = cross_entropy(logits, targets)
    jax.block_until_ready(loss)
    ref = -jnp.mean(jax.nn.log_softmax(logits, axis=-1)[jnp.arange(N), targets])
    assert jnp.allclose(loss, ref, atol=1e-5, rtol=1e-5), (loss, ref)

    # Case 2: force the class-chunked online-logsumexp path at small shapes
    # (3 class chunks of 128, the last one padded 320 -> 384).
    N2, C2 = 12, 320
    logits2 = jax.random.normal(k3, (N2, C2), dtype=jnp.float32)
    targets2 = jax.random.randint(k4, (N2,), 0, C2, dtype=jnp.int32)
    loss2 = cross_entropy(logits2, targets2, block_classes=128)
    jax.block_until_ready(loss2)
    ref2 = -jnp.mean(jax.nn.log_softmax(logits2, axis=-1)[jnp.arange(N2), targets2])
    assert jnp.allclose(loss2, ref2, atol=1e-5, rtol=1e-5), (loss2, ref2)

    print("KERNEL_OK")
</pallas_src>

<mosaic_0001>
module attributes {stable_mosaic.version = 11 : i64} {
  func.func @_cross_entropy_kernel(%arg0: i32, %arg1: i32, %arg2: memref<16x32xf32, #tpu.memory_space<vmem>>, %arg3: memref<16x1xi32, #tpu.memory_space<vmem>>, %arg4: memref<16x1xf32, #tpu.memory_space<vmem>>, %arg5: memref<16x1xf32, #tpu.memory_space<vmem>>, %arg6: memref<16x1xf32, #tpu.memory_space<vmem>>, %arg7: memref<16x1xf32, #tpu.memory_space<vmem>>) attributes {dimension_semantics = [#tpu.dimension_semantics<parallel>, #tpu.dimension_semantics<arbitrary>], iteration_bounds = array<i64: 1, 1>, scalar_prefetch = 0 : i64, scratch_operands = 3 : i64, tpu.core_type = #tpu.core_type<tc>, window_params = [{transform_indices = @transform_0, window_bounds = array<i64: 16, 32>}, {transform_indices = @transform_1, window_bounds = array<i64: 16, 1>}, {transform_indices = @transform_2, window_bounds = array<i64: 16, 1>}]} {
    %c0_i32 = arith.constant 0 : i32
    %0 = arith.cmpi eq, %arg1, %c0_i32 : i32
    %1 = arith.extui %0 : i1 to i32
    %c0_i32_0 = arith.constant 0 : i32
    %2 = arith.cmpi ne, %1, %c0_i32_0 : i32
    scf.if %2 {
      %cst_23 = arith.constant -3.40282347E+38 : f32
      %41 = vector.broadcast %cst_23 : f32 to vector<16x1xf32>
      %c0_24 = arith.constant 0 : index
      %c0_25 = arith.constant 0 : index
      %42 = vector.load %arg5[%c0_24, %c0_25] : memref<16x1xf32, #tpu.memory_space<vmem>>, vector<16x1xf32>
      tpu.vector_store %arg5[%c0_24, %c0_25], %41 {strides = array<i32>} : memref<16x1xf32, #tpu.memory_space<vmem>>, vector<16x1xf32>,
      %cst_26 = arith.constant 0.000000e+00 : f32
      %43 = vector.broadcast %cst_26 : f32 to vector<16x1xf32>
      %c0_27 = arith.constant 0 : index
      %c0_28 = arith.constant 0 : index
      %44 = vector.load %arg6[%c0_27, %c0_28] : memref<16x1xf32, #tpu.memory_space<vmem>>, vector<16x1xf32>
      tpu.vector_store %arg6[%c0_27, %c0_28], %43 {strides = array<i32>} : memref<16x1xf32, #tpu.memory_space<vmem>>, vector<16x1xf32>,
      %cst_29 = arith.constant 0.000000e+00 : f32
      %45 = vector.broadcast %cst_29 : f32 to vector<16x1xf32>
      %c0_30 = arith.constant 0 : index
      %c0_31 = arith.constant 0 : index
      %46 = vector.load %arg7[%c0_30, %c0_31] : memref<16x1xf32, #tpu.memory_space<vmem>>, vector<16x1xf32>
      tpu.vector_store %arg7[%c0_30, %c0_31], %45 {strides = array<i32>} : memref<16x1xf32, #tpu.memory_space<vmem>>, vector<16x1xf32>,
    } else {
    }
    %c0 = arith.constant 0 : index
    %c0_1 = arith.constant 0 : index
    %3 = vector.load %arg2[%c0, %c0_1] : memref<16x32xf32, #tpu.memory_space<vmem>>, vector<16x32xf32>
    %c0_2 = arith.constant 0 : index
    %c0_3 = arith.constant 0 : index
    %4 = vector.load %arg3[%c0_2, %c0_3] : memref<16x1xi32, #tpu.memory_space<vmem>>, vector<16x1xi32>
    %c32_i32 = arith.constant 32 : i32
    %5 = arith.muli %arg1, %c32_i32 : i32
    %6 = tpu.iota {dimensions = array<i32: 1>} : vector<16x32xi32>
    %7 = vector.broadcast %5 : i32 to vector<16x32xi32>
    %8 = arith.addi %7, %6 : vector<16x32xi32>
    %c32_i32_4 = arith.constant 32 : i32
    %9 = vector.broadcast %c32_i32_4 : i32 to vector<16x32xi32>
    %10 = arith.cmpi slt, %8, %9 : vector<16x32xi32>
    %cst = arith.constant -3.40282347E+38 : f32
    %11 = vector.broadcast %cst : f32 to vector<16x32xf32>
    %12 = arith.select %10, %3, %11 : vector<16x32xi1>, vector<16x32xf32>
    %c0_5 = arith.constant 0 : index
    %c0_6 = arith.constant 0 : index
    %13 = vector.load %arg5[%c0_5, %c0_6] : memref<16x1xf32, #tpu.memory_space<vmem>>, vector<16x1xf32>
    %cst_7 = arith.constant dense<0xFF800000> : vector<16xf32>
    %14 = vector.multi_reduction <maximumf>, %12, %cst_7 [1] : vector<16x32xf32> to vector<16xf32>
    %15 = vector.shape_cast %14 : vector<16xf32> to vector<16x1xf32>
    %16 = arith.maximumf %13, %15 : vector<16x1xf32>
    %c0_8 = arith.constant 0 : index
    %c0_9 = arith.constant 0 : index
    %17 = vector.load %arg6[%c0_8, %c0_9] : memref<16x1xf32, #tpu.memory_space<vmem>>, vector<16x1xf32>
    %18 = arith.subf %13, %16 : vector<16x1xf32>
    %19 = math.exp %18 : vector<16x1xf32>
    %20 = arith.mulf %17, %19 : vector<16x1xf32>
    %21 = vector.broadcast %16 : vector<16x1xf32> to vector<16x32xf32>
    %22 = arith.subf %12, %21 : vector<16x32xf32>
    %23 = math.exp %22 : vector<16x32xf32>
    %cst_10 = arith.constant dense<0.000000e+00> : vector<16xf32>
    %24 = vector.multi_reduction <add>, %23, %cst_10 [1] : vector<16x32xf32> to vector<16xf32>
    %25 = vector.shape_cast %24 : vector<16xf32> to vector<16x1xf32>
    %26 = arith.addf %20, %25 : vector<16x1xf32>
    %c0_11 = arith.constant 0 : index
    %c0_12 = arith.constant 0 : index
    %27 = vector.load %arg6[%c0_11, %c0_12] : memref<16x1xf32, #tpu.memory_space<vmem>>, vector<16x1xf32>
    tpu.vector_store %arg6[%c0_11, %c0_12], %26 {strides = array<i32>} : memref<16x1xf32, #tpu.memory_space<vmem>>, vector<16x1xf32>,
    %c0_13 = arith.constant 0 : index
    %c0_14 = arith.constant 0 : index
    %28 = vector.load %arg5[%c0_13, %c0_14] : memref<16x1xf32, #tpu.memory_space<vmem>>, vector<16x1xf32>
    tpu.vector_store %arg5[%c0_13, %c0_14], %16 {strides = array<i32>} : memref<16x1xf32, #tpu.memory_space<vmem>>, vector<16x1xf32>,
    %c0_15 = arith.constant 0 : index
    %c0_16 = arith.constant 0 : index
    %29 = vector.load %arg7[%c0_15, %c0_16] : memref<16x1xf32, #tpu.memory_space<vmem>>, vector<16x1xf32>
    %30 = vector.broadcast %4 : vector<16x1xi32> to vector<16x32xi32>
    %31 = arith.cmpi eq, %8, %30 : vector<16x32xi32>
    %cst_17 = arith.constant 0.000000e+00 : f32
    %32 = vector.broadcast %cst_17 : f32 to vector<16x32xf32>
    %33 = arith.select %31, %3, %32 : vector<16x32xi1>, vector<16x32xf32>
    %cst_18 = arith.constant dense<0.000000e+00> : vector<16xf32>
    %34 = vector.multi_reduction <add>, %33, %cst_18 [1] : vector<16x32xf32> to vector<16xf32>
    %35 = vector.shape_cast %34 : vector<16xf32> to vector<16x1xf32>
    %36 = arith.addf %29, %35 : vector<16x1xf32>
    %c0_19 = arith.constant 0 : index
    %c0_20 = arith.constant 0 : index
    %37 = vector.load %arg7[%c0_19, %c0_20] : memref<16x1xf32, #tpu.memory_space<vmem>>, vector<16x1xf32>
    tpu.vector_store %arg7[%c0_19, %c0_20], %36 {strides = array<i32>} : memref<16x1xf32, #tpu.memory_space<vmem>>, vector<16x1xf32>,
    %c0_i32_21 = arith.constant 0 : i32
    %38 = arith.cmpi eq, %arg1, %c0_i32_21 : i32
    %39 = arith.extui %38 : i1 to i32
    %c0_i32_22 = arith.constant 0 : i32
    %40 = arith.cmpi ne, %39, %c0_i32_22 : i32
    scf.if %40 {
      %c0_23 = arith.constant 0 : index
      %c0_24 = arith.constant 0 : index
      %41 = vector.load %arg5[%c0_23, %c0_24] : memref<16x1xf32, #tpu.memory_space<vmem>>, vector<16x1xf32>
      %c0_25 = arith.constant 0 : index
      %c0_26 = arith.constant 0 : index
      %42 = vector.load %arg6[%c0_25, %c0_26] : memref<16x1xf32, #tpu.memory_space<vmem>>, vector<16x1xf32>
      %43 = math.log %42 : vector<16x1xf32>
      %44 = arith.addf %41, %43 : vector<16x1xf32>
      %c0_27 = arith.constant 0 : index
      %c0_28 = arith.constant 0 : index
      %45 = vector.load %arg7[%c0_27, %c0_28] : memref<16x1xf32, #tpu.memory_space<vmem>>, vector<16x1xf32>
      %46 = arith.subf %44, %45 : vector<16x1xf32>
      %c16_i32 = arith.constant 16 : i32
      %47 = arith.muli %arg0, %c16_i32 : i32
      %48 = tpu.iota {dimensions = array<i32: 0>} : vector<16x1xi32>
      %49 = vector.broadcast %47 : i32 to vector<16x1xi32>
      %50 = arith.addi %49, %48 : vector<16x1xi32>
      %c10_i32 = arith.constant 10 : i32
      %51 = vector.broadcast %c10_i32 : i32 to vector<16x1xi32>
      %52 = arith.cmpi slt, %50, %51 : vector<16x1xi32>
      %cst_29 = arith.constant 0.000000e+00 : f32
      %53 = vector.broadcast %cst_29 : f32 to vector<16x1xf32>
      %54 = arith.select %52, %46, %53 : vector<16x1xi1>, vector<16x1xf32>
      %c0_30 = arith.constant 0 : index
      %c0_31 = arith.constant 0 : index
      %55 = vector.load %arg4[%c0_30, %c0_31] : memref<16x1xf32, #tpu.memory_space<vmem>>, vector<16x1xf32>
      tpu.vector_store %arg4[%c0_30, %c0_31], %54 {strides = array<i32>} : memref<16x1xf32, #tpu.memory_space<vmem>>, vector<16x1xf32>,
    } else {
    }
    return
  }
  func.func @transform_0(%arg0: i32, %arg1: i32) -> (i32, i32) {
    %c0_i32 = arith.constant 0 : i32
    return %arg0, %arg1 : i32, i32
  }
  func.func @transform_1(%arg0: i32, %arg1: i32) -> (i32, i32) {
    %c0_i32 = arith.constant 0 : i32
    %c0_i32_0 = arith.constant 0 : i32
    return %arg0, %c0_i32 : i32, i32
  }
  func.func @transform_2(%arg0: i32, %arg1: i32) -> (i32, i32) {
    %c0_i32 = arith.constant 0 : i32
    %c0_i32_0 = arith.constant 0 : i32
    return %arg0, %c0_i32 : i32, i32
  }
}

</mosaic_0001>

<llo_original>
// kernel: tpu_custom_call.1
$region0: #{tpu_custom_call.1}
  #allocation0 [shape = 'u32[]', space=smem, size = 0x4, offset = 0x4, fixed_abs, tag = 'smem constant byte address 0x4 - core index']
  #allocation1 [shape = 'u32[144,128]{1,0:T(1,128)}', space=vmem, size = 0x12000, scoped, tag = 'internal scratch']
  #allocation2 [shape = 'f32[16,1]{1,0:T(8,128)}', space=vmem, size = 0x2000, scoped, tag = 'scratch operand']
  #allocation3 [shape = 'f32[16,1]{1,0:T(8,128)}', space=vmem, size = 0x2000, scoped, tag = 'scratch operand']
  #allocation4 [shape = 'f32[16,1]{1,0:T(8,128)}', space=vmem, size = 0x2000, scoped, tag = 'scratch operand']
  %s0 = inlined_call_operand.vmem [shape: f32[16,32], index: 0, kind: input, shape index: {}]
  %s1 = inlined_call_operand.vmem [shape: s32[16,1], index: 1, kind: input, shape index: {}]
  %s2 = inlined_call_operand.vmem [shape: f32[16,1], index: 2, kind: output, shape index: {}]
  %s3 = sld [smem:[#allocation0]]
  $region26: #{tpu_custom_call.1} parent=0
    _
  %s5 = ssub.s32 1, %s3
  %s6 = scalar_select 0, %s5, %s3
  // Predicated region
  $region2: #{tpu_custom_call.1} parent=0 // pred_check
    _
  $region3: #{tpu_custom_call.1} parent=0 // pred_check_branch
    %8 = sbr.rel (0) target = $region5
  $region4: #{tpu_custom_call.1} parent=0 // pred_region
    _
  $region5: #{tpu_custom_call.1} parent=0 // pred_fallthru
    _
  // Predicated region
  $region6: #{tpu_custom_call.1} parent=0 // pred_check
    _
  $region7: #{tpu_custom_call.1} parent=0 // pred_check_branch
    %10 = sbr.rel (0) target = $region9
  $region8: #{tpu_custom_call.1} parent=0 // pred_region
    _
  $region9: #{tpu_custom_call.1} parent=0 // pred_fallthru
    _
  %p11 = scmp.eq.s32.totalorder 0, 0
  // Predicated region
  $region10: #{tpu_custom_call.1} parent=0 // pred_check
    %p12 = pneg %p11
  $region11: #{tpu_custom_call.1} parent=0 // pred_check_branch
    %14 = sbr.rel (%p12) target = $region13
  $region12: #{tpu_custom_call.1} parent=0 // pred_region
    %vm15 = vcmask 7168
    %16 = vst.msk [vmem:[#allocation2] sm:$0xff] %vm15, -3.4028235e+38
    %17 = vst.msk [vmem:[#allocation2 + $0x8] sm:$0xff] %vm15, -3.4028235e+38
    %18 = vst.msk [vmem:[#allocation3] sm:$0xff] %vm15, 0.0
    %19 = vst.msk [vmem:[#allocation3 + $0x8] sm:$0xff] %vm15, 0.0
    %20 = vst.msk [vmem:[#allocation4] sm:$0xff] %vm15, 0.0
    %21 = vst.msk [vmem:[#allocation4 + $0x8] sm:$0xff] %vm15, 0.0
  $region13: #{tpu_custom_call.1} parent=0 // pred_fallthru
    _
  %v22 = vld [vmem:[%s0] sm:$0xff]
  %v23 = vld [vmem:[%s0 + $0x8] sm:$0xff]
  %v24 = vld [vmem:[%s1] sm:$0xff]
  %v25 = vld [vmem:[%s1 + $0x8] sm:$0xff]
  %s26 = smul.u32 0, 32
  %v27 = vlaneseq
  %v28 = vand.u32 %v27, 127
  %v29 = vstv %s26
  %v30 = vadd.s32 %v29, %v28
  %vm31 = vcmp.lt.s32.totalorder %v30, 32
  %v32 = vsel %vm31, %v22, -3.4028235e+38
  %v33 = vsel %vm31, %v23, -3.4028235e+38
  %v34 = vld [vmem:[#allocation2] sm:$0xff]
  %v35 = vld [vmem:[#allocation2 + $0x8] sm:$0xff]
  %vm36 = vcmask 261120
  %v37 = vsel %vm36, %v32, -inf
  %38 = vmax.xlane.f32.xlu0 %v37
  %v39 = vpop.xlane.xlu0 %38
  %v40 = vsel %vm36, %v33, -inf
  %41 = vmax.xlane.f32.xlu0 %v40
  %v42 = vpop.xlane.xlu0 %41
  %v43 = vmax.f32 %v34, %v39
  %v44 = vmax.f32 %v35, %v42
  %v45 = vld [vmem:[#allocation3] sm:$0xff]
  %v46 = vld [vmem:[#allocation3 + $0x8] sm:$0xff]
  %v47 = vsub.f32 %v34, %v43
  %v48 = vsub.f32 %v35, %v44
  %v49 = vmul.f32 %v47, 1.442695
  %v50 = vpow.pop %v49
  %v51 = vmul.f32 %v48, 1.442695
  %v52 = vpow.pop %v51
  %v53 = vmul.f32 %v45, %v50
  %v54 = vmul.f32 %v46, %v52
  %56 = vset.pattern.permute.xlu0 0
  %57 = vperm.xlu0 %56, %v43
  %v58 = vpop.permute.xlu0 %57
  %61 = vset.pattern.permute.xlu0 0
  %62 = vperm.xlu0 %61, %v44
  %v63 = vpop.permute.xlu0 %62
  %v65 = vsub.f32 %v32, %v58
  %v66 = vsub.f32 %v33, %v63
  %v67 = vmul.f32 %v65, 1.442695
  %v68 = vpow.pop %v67
  %v69 = vmul.f32 %v66, 1.442695
  %v70 = vpow.pop %v69
  %v71 = vsel %vm36, %v68, 0.0
  %72 = vadd.xlane.f32.xlu0 %v71
  %v73 = vpop.xlane.xlu0 %72
  %v74 = vsel %vm36, %v70, 0.0
  %75 = vadd.xlane.f32.xlu0 %v74
  %v76 = vpop.xlane.xlu0 %75
  %v77 = vadd.f32 %v53, %v73
  %v78 = vadd.f32 %v54, %v76
  %vm79 = vcmask 7168
  %80 = vst.msk [vmem:[#allocation3] sm:$0xff] %vm79, %v77
  %81 = vst.msk [vmem:[#allocation3 + $0x8] sm:$0xff] %vm79, %v78
  %82 = vst.msk [vmem:[#allocation2] sm:$0xff] %vm79, %v43
  %83 = vst.msk [vmem:[#allocation2 + $0x8] sm:$0xff] %vm79, %v44
  %v84 = vld [vmem:[#allocation4] sm:$0xff]
  %v85 = vld [vmem:[#allocation4 + $0x8] sm:$0xff]
  %86 = vset.pattern.permute.xlu0 0
  %87 = vperm.xlu0 %86, %v24
  %v88 = vpop.permute.xlu0 %87
  %89 = vset.pattern.permute.xlu0 0
  %90 = vperm.xlu0 %89, %v25
  %v91 = vpop.permute.xlu0 %90
  %vm92 = vcmp.eq.s32.totalorder %v30, %v88
  %vm93 = vcmp.eq.s32.totalorder %v30, %v91
  %v94 = vsel %vm92, %v22, 0.0
  %v95 = vsel %vm93, %v23, 0.0
  %v96 = vsel %vm36, %v94, 0.0
  %97 = vadd.xlane.f32.xlu0 %v96
  %v98 = vpop.xlane.xlu0 %97
  %v99 = vsel %vm36, %v95, 0.0
  %100 = vadd.xlane.f32.xlu0 %v99
  %v101 = vpop.xlane.xlu0 %100
  %v102 = vadd.f32 %v84, %v98
  %v103 = vadd.f32 %v85, %v101
  %104 = vst.msk [vmem:[#allocation4] sm:$0xff] %vm79, %v102
  %105 = vst.msk [vmem:[#allocation4 + $0x8] sm:$0xff] %vm79, %v103
  // Predicated region
  $region14: #{tpu_custom_call.1} parent=0 // pred_check
    %p106 = pneg %p11
  $region15: #{tpu_custom_call.1} parent=0 // pred_check_branch
    %108 = sbr.rel (%p106) target = $region17
  $region16: #{tpu_custom_call.1} parent=0 // pred_region
    %v109 = vld [vmem:[#allocation2] sm:$0xff]
    %v110 = vld [vmem:[#allocation2 + $0x8] sm:$0xff]
    %v111 = vld [vmem:[#allocation3] sm:$0xff]
    %v112 = vld [vmem:[#allocation3 + $0x8] sm:$0xff]
    %v113 = vlog2.pop %v111
    %v114 = vmul.f32 %v113, 0.6931472
    %v115 = vlog2.pop %v112
    %v116 = vmul.f32 %v115, 0.6931472
    %v117 = vadd.f32 %v109, %v114
    %v118 = vadd.f32 %v110, %v116
    %v119 = vld [vmem:[#allocation4] sm:$0xff]
    %v120 = vld [vmem:[#allocation4 + $0x8] sm:$0xff]
    %v121 = vsub.f32 %v117, %v119
    %v122 = vsub.f32 %v118, %v120
    %s123 = smul.u32 0, 16
    %v124 = vlaneseq
    %v125 = vshrl.u32 %v124, 7
    %v126 = vadd.s32 %v125, 8
    %v127 = vstv %s123
    %v128 = vadd.s32 %v127, %v125
    %v129 = vadd.s32 %v127, %v126
    %vm130 = vcmp.lt.s32.totalorder %v128, 10
    %vm131 = vcmp.lt.s32.totalorder %v129, 10
    %v132 = vsel %vm130, %v121, 0.0
    %v133 = vsel %vm131, %v122, 0.0
    %134 = vst.msk [vmem:[%s2] sm:$0xff] %vm79, %v132
    %135 = vst.msk [vmem:[%s2 + $0x8] sm:$0xff] %vm79, %v133
  $region17: #{tpu_custom_call.1} parent=0 // pred_fallthru
    _
  // Predicated region
  $region18: #{tpu_custom_call.1} parent=0 // pred_check
    _
  $region19: #{tpu_custom_call.1} parent=0 // pred_check_branch
    %137 = sbr.rel (0) target = $region21
  $region20: #{tpu_custom_call.1} parent=0 // pred_region
    _
  $region21: #{tpu_custom_call.1} parent=0 // pred_fallthru
    _
  // Predicated region
  $region22: #{tpu_custom_call.1} parent=0 // pred_check
    _
  $region23: #{tpu_custom_call.1} parent=0 // pred_check_branch
    %139 = sbr.rel (0) target = $region25
  $region24: #{tpu_custom_call.1} parent=0 // pred_region
    _
  $region25: #{tpu_custom_call.1} parent=0 // pred_fallthru
    _

</llo_original>
